<compile_context>
chip_gen: v7x
topology: tpu7x:2x2x1
jax: 0.10.0
libtpu: 0.0.40
codegen_flags: <defaults>
</compile_context>

<pallas_src>
import functools

import jax
import jax.numpy as jnp
from jax.experimental import pallas as pl
from jax.experimental.pallas import tpu as pltpu

LANES = 128
SUBLANES = 8


def _device_config():
    """(per-input block byte budget, scoped-VMEM override bytes, tensorcores)."""
    try:
        kind = jax.devices()[0].device_kind.lower()
    except Exception:
        kind = ""
    if "v7" in kind:            # 2 TCs, 64 MiB VMEM/TC, ~3.2 TB/s HBM per TC
        return (4 << 20, 48 << 20, 2)
    if "v6" in kind:            # 128 MiB VMEM, ~1.4 TB/s HBM
        return (4 << 20, 64 << 20, 1)
    if "v5" in kind:            # v5e: small default scoped VMEM -> modest blocks
        return (2 << 20, 64 << 20, 1)
    return (1 << 20, None, 1)   # unknown generation: conservative, default VMEM


def _mse_kernel(x_ref, y_ref, o_ref, acc_ref, *,
                rows, steps, block_rows, inv_n, needs_mask):
    s = pl.program_id(0)          # shard axis (TensorCores)
    i = pl.program_id(1)          # reduction axis (row blocks within shard)

    @pl.when(i == 0)
    def _():
        acc_ref[...] = jnp.zeros_like(acc_ref)

    # Cast in-kernel; inputs stay in their original dtype in HBM.
    x = x_ref[...].astype(jnp.float32)
    y = y_ref[...].astype(jnp.float32)

    if needs_mask:
        # The final row block overhangs the array; its OOB rows contain stale
        # VMEM (possibly NaN/Inf).  Select-out BOTH operands before the subtract
        # so garbage never reaches the accumulator (select sanitizes NaN).
        row0 = (s * steps + i) * block_rows
        rid = row0 + jax.lax.broadcasted_iota(jnp.int32, (block_rows, 1), 0)
        valid = rid < rows
        x = jnp.where(valid, x, 0.0)
        y = jnp.where(valid, y, 0.0)

    d = x - y
    sq = d * d
    if block_rows % SUBLANES == 0:
        # Fold (block_rows, 128) into the (8, 128) accumulator: pure VPU adds,
        # no cross-lane/sublane work on the hot path.
        acc_ref[...] += sq.reshape(-1, SUBLANES, LANES).sum(axis=0)
    else:
        # Rare single-block case (block_rows == rows, not sublane-aligned):
        # one cross-sublane reduce, added into the first accumulator row.
        acc_ref[0:1, :] += jnp.sum(sq, axis=0, keepdims=True)

    @pl.when(i == pl.num_programs(1) - 1)
    def _():
        # Lane-dense, tile-aligned (1, 8, 128) partial per shard; the final
        # cross-lane reduction happens once, in the wrapper.
        o_ref[...] = (acc_ref[...] * inv_n).reshape(1, SUBLANES, LANES)


def mse_gating_loss(gating_outputs, true_gating_values):
    """Pallas equivalent of nn.MSELoss()(gating_outputs, true_gating_values)."""
    assert gating_outputs.shape == true_gating_values.shape
    n_elem = gating_outputs.size
    block_bytes, vmem_limit, num_cores = _device_config()

    xf = gating_outputs.reshape(-1)
    yf = true_gating_values.reshape(-1)

    rows = pl.cdiv(n_elem, LANES)
    if rows * LANES != n_elem:
        # TODO(synk): minimal pad to the next 128-lane boundary (a copy); only
        # fires when the element count is not a multiple of 128 (rare for NN
        # tensors).  All other raggedness is handled in-kernel, copy-free.
        pad = rows * LANES - n_elem
        xf = jnp.pad(xf, (0, pad))
        yf = jnp.pad(yf, (0, pad))
    x2 = xf.reshape(rows, LANES)
    y2 = yf.reshape(rows, LANES)

    # Sublane packing of the narrowest dtype (f32 -> 8, bf16 -> 16, int8 -> 32)
    # and dtype-aware per-input block budget (bytes -> rows).
    itemsizes = [jnp.dtype(a.dtype).itemsize for a in (x2, y2)]
    packing = max(SUBLANES * max(1, 4 // it) for it in itemsizes)
    cap = max(packing, (block_bytes // (LANES * max(itemsizes))) // packing * packing)

    # Split rows across TensorCores only when the chip has >1 TC and each shard
    # still gets well-formed, in-bounds blocks.
    shards = num_cores if (num_cores > 1 and rows >= 8 * num_cores * packing) else 1
    shard_rows = pl.cdiv(rows, shards)
    steps = pl.cdiv(shard_rows, cap)
    if shards == 1 and steps == 1:
        block_rows = rows            # single full-array block: no overhang, no mask
    else:
        block_rows = pl.cdiv(pl.cdiv(shard_rows, steps), packing) * packing
    needs_mask = (shards * steps * block_rows) != rows

    kernel = functools.partial(
        _mse_kernel, rows=rows, steps=steps, block_rows=block_rows,
        inv_n=1.0 / float(n_elem), needs_mask=needs_mask)

    compiler_kwargs = {}
    if vmem_limit is not None:
        compiler_kwargs["vmem_limit_bytes"] = vmem_limit
    shard_sem = pltpu.CORE_PARALLEL if shards > 1 else pltpu.PARALLEL

    partials = pl.pallas_call(
        kernel,
        out_shape=jax.ShapeDtypeStruct((shards, SUBLANES, LANES), jnp.float32),
        grid_spec=pltpu.PrefetchScalarGridSpec(
            num_scalar_prefetch=0,
            grid=(shards, steps),
            in_specs=[
                pl.BlockSpec((block_rows, LANES), lambda s, i: (s * steps + i, 0)),
                pl.BlockSpec((block_rows, LANES), lambda s, i: (s * steps + i, 0)),
            ],
            out_specs=pl.BlockSpec((1, SUBLANES, LANES), lambda s, i: (s, 0, 0)),
            scratch_shapes=[pltpu.VMEM((SUBLANES, LANES), jnp.float32)],
        ),
        compiler_params=pltpu.CompilerParams(
            dimension_semantics=(shard_sem, pltpu.ARBITRARY),
            **compiler_kwargs,
        ),
    )(x2, y2)

    # Each shard emitted (sum_of_squares_in_shard / n_elem) spread over a tile;
    # the total mean is the sum of everything.
    return jnp.sum(partials)


if __name__ == "__main__":
    key = jax.random.PRNGKey(0)
    k1, k2, k3, k4 = jax.random.split(key, 4)

    # Gating-style outputs (per-pixel gating maps, NCHW): batch=2, ch=4, 16x16.
    x = jax.random.uniform(k1, (2, 4, 16, 16), dtype=jnp.float32)
    y = jax.random.uniform(k2, (2, 4, 16, 16), dtype=jnp.float32)

    loss = mse_gating_loss(x, y)
    jax.block_until_ready(loss)
    ref = jnp.mean((x - y) ** 2)
    assert jnp.allclose(loss, ref, rtol=1e-6, atol=1e-6), (loss, ref)

    # Ragged element count (not a multiple of 128): exercises the tail handling.
    xr = jax.random.uniform(k3, (3, 5, 7, 11), dtype=jnp.float32)
    yr = jax.random.uniform(k4, (3, 5, 7, 11), dtype=jnp.float32)
    loss_r = mse_gating_loss(xr, yr)
    jax.block_until_ready(loss_r)
    ref_r = jnp.mean((xr - yr) ** 2)
    assert jnp.allclose(loss_r, ref_r, rtol=1e-6, atol=1e-6), (loss_r, ref_r)

    print("KERNEL_OK")
</pallas_src>

<mosaic_0001>
module attributes {stable_mosaic.version = 11 : i64} {
  func.func @_mse_kernel(%arg0: i32, %arg1: i32, %arg2: memref<16x128xf32, #tpu.memory_space<vmem>>, %arg3: memref<16x128xf32, #tpu.memory_space<vmem>>, %arg4: memref<1x8x128xf32, #tpu.memory_space<vmem>>, %arg5: memref<8x128xf32, #tpu.memory_space<vmem>>) attributes {dimension_semantics = [#tpu.dimension_semantics<parallel>, #tpu.dimension_semantics<arbitrary>], iteration_bounds = array<i64: 1, 1>, scalar_prefetch = 0 : i64, scratch_operands = 1 : i64, tpu.core_type = #tpu.core_type<tc>, window_params = [{transform_indices = @transform_0, window_bounds = array<i64: 16, 128>}, {transform_indices = @transform_1, window_bounds = array<i64: 16, 128>}, {transform_indices = @transform_2, window_bounds = array<i64: 1, 8, 128>}]} {
    %c0_i32 = arith.constant 0 : i32
    %0 = arith.cmpi eq, %arg1, %c0_i32 : i32
    %1 = arith.extui %0 : i1 to i32
    %c0_i32_0 = arith.constant 0 : i32
    %2 = arith.cmpi ne, %1, %c0_i32_0 : i32
    scf.if %2 {
      %cst_10 = arith.constant 0.000000e+00 : f32
      %15 = vector.broadcast %cst_10 : f32 to vector<8x128xf32>
      %c0_11 = arith.constant 0 : index
      %c0_12 = arith.constant 0 : index
      %16 = vector.load %arg5[%c0_11, %c0_12] : memref<8x128xf32, #tpu.memory_space<vmem>>, vector<8x128xf32>
      tpu.vector_store %arg5[%c0_11, %c0_12], %15 {strides = array<i32>} : memref<8x128xf32, #tpu.memory_space<vmem>>, vector<8x128xf32>,
    } else {
    }
    %c0 = arith.constant 0 : index
    %c0_1 = arith.constant 0 : index
    %3 = vector.load %arg2[%c0, %c0_1] : memref<16x128xf32, #tpu.memory_space<vmem>>, vector<16x128xf32>
    %c0_2 = arith.constant 0 : index
    %c0_3 = arith.constant 0 : index
    %4 = vector.load %arg3[%c0_2, %c0_3] : memref<16x128xf32, #tpu.memory_space<vmem>>, vector<16x128xf32>
    %5 = arith.subf %3, %4 : vector<16x128xf32>
    %6 = arith.mulf %5, %5 : vector<16x128xf32>
    %c0_4 = arith.constant 0 : index
    %c0_5 = arith.constant 0 : index
    %7 = vector.load %arg5[%c0_4, %c0_5] : memref<8x128xf32, #tpu.memory_space<vmem>>, vector<8x128xf32>
    %8 = vector.shape_cast %6 : vector<16x128xf32> to vector<2x8x128xf32>
    %cst = arith.constant dense<0.000000e+00> : vector<8x128xf32>
    %9 = vector.multi_reduction <add>, %8, %cst [0] : vector<2x8x128xf32> to vector<8x128xf32>
    %10 = arith.addf %7, %9 : vector<8x128xf32>
    %c0_6 = arith.constant 0 : index
    %c0_7 = arith.constant 0 : index
    %11 = vector.load %arg5[%c0_6, %c0_7] : memref<8x128xf32, #tpu.memory_space<vmem>>, vector<8x128xf32>
    tpu.vector_store %arg5[%c0_6, %c0_7], %10 {strides = array<i32>} : memref<8x128xf32, #tpu.memory_space<vmem>>, vector<8x128xf32>,
    %c0_i32_8 = arith.constant 0 : i32
    %12 = arith.cmpi eq, %arg1, %c0_i32_8 : i32
    %13 = arith.extui %12 : i1 to i32
    %c0_i32_9 = arith.constant 0 : i32
    %14 = arith.cmpi ne, %13, %c0_i32_9 : i32
    scf.if %14 {
      %c0_10 = arith.constant 0 : index
      %c0_11 = arith.constant 0 : index
      %15 = vector.load %arg5[%c0_10, %c0_11] : memref<8x128xf32, #tpu.memory_space<vmem>>, vector<8x128xf32>
      %cst_12 = arith.constant 4.8828125E-4 : f32
      %16 = vector.broadcast %cst_12 : f32 to vector<8x128xf32>
      %17 = arith.mulf %15, %16 : vector<8x128xf32>
      %18 = vector.shape_cast %17 : vector<8x128xf32> to vector<1x8x128xf32>
      %c0_13 = arith.constant 0 : index
      %c0_14 = arith.constant 0 : index
      %c0_15 = arith.constant 0 : index
      %19 = vector.load %arg4[%c0_13, %c0_14, %c0_15] : memref<1x8x128xf32, #tpu.memory_space<vmem>>, vector<1x8x128xf32>
      tpu.vector_store %arg4[%c0_13, %c0_14, %c0_15], %18 {strides = array<i32>} : memref<1x8x128xf32, #tpu.memory_space<vmem>>, vector<1x8x128xf32>,
    } else {
    }
    return
  }
  func.func @transform_0(%arg0: i32, %arg1: i32) -> (i32, i32) {
    %c1_i32 = arith.constant 1 : i32
    %0 = arith.muli %arg0, %c1_i32 : i32
    %1 = arith.addi %0, %arg1 : i32
    %c0_i32 = arith.constant 0 : i32
    %c0_i32_0 = arith.constant 0 : i32
    return %1, %c0_i32 : i32, i32
  }
  func.func @transform_1(%arg0: i32, %arg1: i32) -> (i32, i32) {
    %c1_i32 = arith.constant 1 : i32
    %0 = arith.muli %arg0, %c1_i32 : i32
    %1 = arith.addi %0, %arg1 : i32
    %c0_i32 = arith.constant 0 : i32
    %c0_i32_0 = arith.constant 0 : i32
    return %1, %c0_i32 : i32, i32
  }
  func.func @transform_2(%arg0: i32, %arg1: i32) -> (i32, i32, i32) {
    %c0_i32 = arith.constant 0 : i32
    %c0_i32_0 = arith.constant 0 : i32
    %c0_i32_1 = arith.constant 0 : i32
    return %arg0, %c0_i32, %c0_i32_0 : i32, i32, i32
  }
}

</mosaic_0001>

<llo_original>
// kernel: tpu_custom_call.1
$region0: #{tpu_custom_call.1}
  #allocation0 [shape = 'u32[]', space=smem, size = 0x4, offset = 0x4, fixed_abs, tag = 'smem constant byte address 0x4 - core index']
  #allocation1 [shape = 'u32[144,128]{1,0:T(1,128)}', space=vmem, size = 0x12000, scoped, tag = 'internal scratch']
  #allocation2 [shape = 'f32[8,128]{1,0:T(8,128)}', space=vmem, size = 0x1000, scoped, tag = 'scratch operand']
  %s0 = inlined_call_operand.hbm [shape: f32[16,128], index: 0, kind: input, shape index: {}]
  %s1 = inlined_call_operand.hbm [shape: f32[16,128], index: 1, kind: input, shape index: {}]
  %s2 = inlined_call_operand.hbm [shape: f32[1,8,128], index: 2, kind: output, shape index: {}]
  %s3 = sld [smem:[#allocation0]]
  $region34: #{tpu_custom_call.1} parent=0
    _
  %s5 = ssub.s32 1, %s3
  %s6 = scalar_select 0, %s5, %s3
  $region1: #{tpu_custom_call.1} parent=0
    #allocation3 [shape = 'u8[8192]{0}', space=vmem, size = 0x2000, scoped, tag = 'input window, operand 0, single buffered']
    #allocation4 [shape = 's32[1]{0}', space=sflag, size = 0x4, scoped, tag = 'scoped memory for tpu_custom_call.1']
    #allocation5 [shape = 's32[1]{0}', space=sflag, size = 0x4, scoped, tag = 'scoped memory for tpu_custom_call.1']
    #allocation6 [shape = 'u8[8192]{0}', space=vmem, size = 0x2000, scoped, tag = 'input window, operand 1, single buffered']
    #allocation7 [shape = 's32[1]{0}', space=sflag, size = 0x4, scoped, tag = 'scoped memory for tpu_custom_call.1']
    #allocation8 [shape = 'u8[4096]{0}', space=vmem, size = 0x1000, scoped, tag = 'output window, operand 0, single buffered']
    %7 = vsyncpa [#allocation4], 0
    %8 = vsyncpa [#allocation7], 0
    %9 = vsyncpa [#allocation5], 0
    // Predicated region
    $region2: #{tpu_custom_call.1} parent=1 // pred_check
      _
    $region3: #{tpu_custom_call.1} parent=1 // pred_check_branch
      %11 = sbr.rel (0) target = $region5
    $region4: #{tpu_custom_call.1} parent=1 // pred_region
      %s12 = sadd.s32 0, 0
      %s13 = smul.u32 2, %s12
      %s15 = ssub.s32 256, 256
      %16 = vsyncadd [#allocation4], %s15
      %s17 = smul.addr %s13, 128
      %s18 = scalar_lea.hbm %s0, %s17
      %s19 = sshll.u32 [#allocation3], 4
      %s20 = int_to_ptr.vmem [resolvable:$true] %s19
      %25 = dma.hbm_to_vmem [thread:$0]  %s18, 256, %s20, [#allocation4], 128, 128, 8
    $region5: #{tpu_custom_call.1} parent=1 // pred_fallthru
      _
    // Predicated region
    $region6: #{tpu_custom_call.1} parent=1 // pred_check
      _
    $region7: #{tpu_custom_call.1} parent=1 // pred_check_branch
      %27 = sbr.rel (0) target = $region9
    $region8: #{tpu_custom_call.1} parent=1 // pred_region
      %s28 = sadd.s32 0, 0
      %s29 = smul.u32 2, %s28
      %s31 = ssub.s32 256, 256
      %32 = vsyncadd [#allocation7], %s31
      %s33 = smul.addr %s29, 128
      %s34 = scalar_lea.hbm %s1, %s33
      %s35 = sshll.u32 [#allocation6], 4
      %s36 = int_to_ptr.vmem [resolvable:$true] %s35
      %41 = dma.hbm_to_vmem [thread:$0]  %s34, 256, %s36, [#allocation7], 128, 128, 8
    $region9: #{tpu_custom_call.1} parent=1 // pred_fallthru
      _
    // Predicated region
    $region10: #{tpu_custom_call.1} parent=1 // pred_check
      _
    $region11: #{tpu_custom_call.1} parent=1 // pred_check_branch
      %43 = sbr.rel (0) target = $region13
    $region12: #{tpu_custom_call.1} parent=1 // pred_region
      %44 = dma.done [#allocation4], 256
    $region13: #{tpu_custom_call.1} parent=1 // pred_fallthru
      _
    // Predicated region
    $region14: #{tpu_custom_call.1} parent=1 // pred_check
      _
    $region15: #{tpu_custom_call.1} parent=1 // pred_check_branch
      %46 = sbr.rel (0) target = $region17
    $region16: #{tpu_custom_call.1} parent=1 // pred_region
      %47 = dma.done [#allocation7], 256
    $region17: #{tpu_custom_call.1} parent=1 // pred_fallthru
      _
    %s48 = sadd.s32 0, 0
    %s49 = smul.u32 2, %s48
    %s50 = sadd.s32 0, 0
    %s51 = smul.u32 2, %s50
    %p52 = scmp.eq.s32.totalorder 0, 0
    // Predicated region
    $region18: #{tpu_custom_call.1} parent=1 // pred_check
      %p53 = pneg %p52
    $region19: #{tpu_custom_call.1} parent=1 // pred_check_branch
      %55 = sbr.rel (%p53) target = $region21
    $region20: #{tpu_custom_call.1} parent=1 // pred_region
      %56 = vst [vmem:[#allocation2] sm:$0xff] 0.0
    $region21: #{tpu_custom_call.1} parent=1 // pred_fallthru
      _
    %v57 = vld [vmem:[#allocation3] sm:$0xff]
    %v58 = vld [vmem:[#allocation3 + $0x8] sm:$0xff]
    %v59 = vld [vmem:[#allocation6] sm:$0xff]
    %v60 = vld [vmem:[#allocation6 + $0x8] sm:$0xff]
    %v61 = vsub.f32 %v57, %v59
    %v62 = vsub.f32 %v58, %v60
    %v63 = vmul.f32 %v61, %v61
    %v64 = vmul.f32 %v62, %v62
    %v65 = vld [vmem:[#allocation2] sm:$0xff]
    %v66 = vadd.f32 %v63, %v64
    %v67 = vadd.f32 %v65, %v66
    %68 = vst [vmem:[#allocation2] sm:$0xff] %v67
    // Predicated region
    $region22: #{tpu_custom_call.1} parent=1 // pred_check
      %p69 = pneg %p52
    $region23: #{tpu_custom_call.1} parent=1 // pred_check_branch
      %71 = sbr.rel (%p69) target = $region25
    $region24: #{tpu_custom_call.1} parent=1 // pred_region
      %v72 = vld [vmem:[#allocation2] sm:$0xff]
      %v73 = vmul.f32 %v72, 0.00048828125
      %74 = vst [vmem:[#allocation8] sm:$0xff] %v73
    $region25: #{tpu_custom_call.1} parent=1 // pred_fallthru
      _
    // Predicated region
    $region26: #{tpu_custom_call.1} parent=1 // pred_check
      _
    $region27: #{tpu_custom_call.1} parent=1 // pred_check_branch
      %76 = sbr.rel (0) target = $region29
    $region28: #{tpu_custom_call.1} parent=1 // pred_region
      %s78 = ssub.s32 128, 128
      %79 = vsyncadd [#allocation5], %s78
      %s81 = sshll.u32 [#allocation8], 4
      %s82 = int_to_ptr.vmem [resolvable:$true] %s81
      %84 = dma.vmem_to_hbm [thread:$0]  %s82, 128, %s2, [#allocation5]
    $region29: #{tpu_custom_call.1} parent=1 // pred_fallthru
      _
    // Predicated region
    $region30: #{tpu_custom_call.1} parent=1 // pred_check
      _
    $region31: #{tpu_custom_call.1} parent=1 // pred_check_branch
      %86 = sbr.rel (0) target = $region33
    $region32: #{tpu_custom_call.1} parent=1 // pred_region
      %87 = dma.done [#allocation5], 128
    $region33: #{tpu_custom_call.1} parent=1 // pred_fallthru
      _
    %88 = vsyncpa [#allocation4], 1
    %89 = vsyncpa [#allocation7], 1
    %90 = vsyncpa [#allocation5], 1

</llo_original>
